<compile_context>
chip_gen: v6e
topology: v6e:2x2x1
jax: 0.10.0
libtpu: 0.0.40
codegen_flags: <defaults>
</compile_context>

<pallas_src>
import functools

import jax
import jax.numpy as jnp
from jax.experimental import pallas as pl
from jax.experimental.pallas import tpu as pltpu

LANES = 128
SUBLANES = 8
_MAX_BLOCK_BYTES = 4 << 20            # ~4 MiB per input per block
_CHUNK_ROWS = 512                     # rows per in-kernel accumulation chunk
_VMEM_LIMIT_BYTES = 32 * 1024 * 1024  # 2 in x 2 bufs x 4 MiB + temps + headroom


def _sublane_multiple(dtype):
    # Rows per packed sublane tile: f32 -> 8, bf16 -> 16, int8/fp8 -> 32.
    itemsize = jnp.dtype(dtype).itemsize
    return SUBLANES * max(1, 4 // itemsize)


def _make_mse_kernel(row_tile, rows_valid, chunk_rows, needs_mask):
    """Builds a kernel computing a per-block (8, 128) partial sum of (real-pred)^2.

    row_tile:   rows per grid block (static, multiple of the sublane packing).
    rows_valid: total valid rows in the 2-D view (static).
    chunk_rows: rows per inner accumulation chunk (static, multiple of packing).
    needs_mask: whether the last grid block is ragged and must be masked.
    """
    full_chunks = row_tile // chunk_rows
    rem_rows = row_tile % chunk_rows  # multiple of the sublane packing

    def accumulate(pred_ref, real_ref, i, masked):
        def chunk_sum(start, nrows):
            p = pred_ref[pl.ds(start, nrows), :].astype(jnp.float32)
            r = real_ref[pl.ds(start, nrows), :].astype(jnp.float32)
            d = r - p
            sq = d * d
            if masked:
                # Only the ragged last grid block pays for this path.
                row_ids = (i * row_tile + start
                           + jax.lax.broadcasted_iota(jnp.int32, (nrows, LANES), 0))
                sq = jnp.where(row_ids < rows_valid, sq, 0.0)
            # Fold (nrows, 128) -> (8, 128): tile-aligned reshape + pure VPU adds.
            return jnp.sum(sq.reshape(nrows // SUBLANES, SUBLANES, LANES), axis=0)

        acc = jnp.zeros((SUBLANES, LANES), jnp.float32)
        if full_chunks > 0:
            def body(g, a):
                start = pl.multiple_of(g * chunk_rows, chunk_rows)
                return a + chunk_sum(start, chunk_rows)
            acc = jax.lax.fori_loop(0, full_chunks, body, acc,
                                    unroll=min(2, full_chunks))
        if rem_rows > 0:
            acc = acc + chunk_sum(full_chunks * chunk_rows, rem_rows)
        return acc

    def kernel(pred_ref, real_ref, out_ref):
        i = pl.program_id(0)
        if needs_mask:
            nb = pl.num_programs(0)

            @pl.when(i < nb - 1)
            def _hot():
                out_ref[0] = accumulate(pred_ref, real_ref, i, masked=False)

            @pl.when(i == nb - 1)
            def _last():
                out_ref[0] = accumulate(pred_ref, real_ref, i, masked=True)
        else:
            out_ref[0] = accumulate(pred_ref, real_ref, i, masked=False)

    return kernel


@functools.partial(jax.jit, static_argnames=("max_block_bytes", "chunk_rows"))
def mse(pred, real, *, max_block_bytes=_MAX_BLOCK_BYTES, chunk_rows=_CHUNK_ROWS):
    """MSE(pred, real) = sum((real - pred)^2) / numel, matching the torch module."""
    assert pred.shape == real.shape, (pred.shape, real.shape)
    n = pred.size

    pred_flat = pred.reshape(-1)
    real_flat = real.reshape(-1)

    itemsize = max(jnp.dtype(pred.dtype).itemsize, jnp.dtype(real.dtype).itemsize)
    align = max(_sublane_multiple(pred.dtype), _sublane_multiple(real.dtype))

    rows = n // LANES
    rows_main = (rows // align) * align   # sublane-packing aligned row count
    n_main = rows_main * LANES

    # Tail (sub-128 elements + non-aligned rows, < ~4K elements): plain JAX.
    if n_main < n:
        dt = (real_flat[n_main:].astype(jnp.float32)
              - pred_flat[n_main:].astype(jnp.float32))
        tail_sum = jnp.sum(dt * dt)
    else:
        tail_sum = jnp.float32(0.0)

    if rows_main == 0:
        return tail_sum / n

    if n_main < n:
        # TODO(synk): this slice feeding the pallas_call may materialize an
        # extra HBM copy of the main slab for ragged-sized inputs; the common
        # case (numel % (align*128) == 0) takes the zero-copy branch below.
        pred_main = jax.lax.slice(pred_flat, (0,), (n_main,))
        real_main = jax.lax.slice(real_flat, (0,), (n_main,))
    else:  # common case: no slice, no pad, no extra HBM pass
        pred_main, real_main = pred_flat, real_flat

    pred2d = pred_main.reshape(rows_main, LANES)  # native dtype, lane-dense
    real2d = real_main.reshape(rows_main, LANES)

    # Static tiling decisions (all Python ints).
    chunk_rows = max(align, (chunk_rows // align) * align)
    row_cap = max_block_bytes // (LANES * itemsize)
    row_cap = max(align, (row_cap // align) * align)
    if row_cap >= chunk_rows:
        row_cap = (row_cap // chunk_rows) * chunk_rows

    if rows_main <= row_cap:
        row_tile = rows_main        # single block, full extent
        num_blocks = 1
        needs_mask = False
    else:
        row_tile = row_cap
        num_blocks = pl.cdiv(rows_main, row_tile)
        needs_mask = (rows_main % row_tile) != 0

    cost = pl.CostEstimate(
        flops=3 * n_main,
        transcendentals=0,
        bytes_accessed=(n_main * (jnp.dtype(pred.dtype).itemsize
                                  + jnp.dtype(real.dtype).itemsize)
                        + num_blocks * SUBLANES * LANES * 4),
    )

    partials = pl.pallas_call(
        _make_mse_kernel(row_tile, rows_main, chunk_rows, needs_mask),
        out_shape=jax.ShapeDtypeStruct((num_blocks, SUBLANES, LANES), jnp.float32),
        grid=(num_blocks,),
        in_specs=[
            pl.BlockSpec((row_tile, LANES), lambda i: (i, 0)),
            pl.BlockSpec((row_tile, LANES), lambda i: (i, 0)),
        ],
        out_specs=pl.BlockSpec((1, SUBLANES, LANES), lambda i: (i, 0, 0)),
        compiler_params=pltpu.CompilerParams(
            dimension_semantics=("parallel",),
            vmem_limit_bytes=_VMEM_LIMIT_BYTES,
        ),
        cost_estimate=cost,
    )(pred2d, real2d)

    total = jnp.sum(partials, dtype=jnp.float32) + tail_sum
    return total / n


if __name__ == "__main__":
    key = jax.random.PRNGKey(0)
    k1, k2, k3, k4 = jax.random.split(key, 4)

    def ref_mse(p, r):
        d = r.astype(jnp.float32) - p.astype(jnp.float32)
        return jnp.sum(d * d) / p.size

    def check(out, ref, rtol=1e-5, atol=1e-6):
        jax.block_until_ready(out)
        assert jnp.allclose(out, ref, rtol=rtol, atol=atol), (out, ref)

    # Primary case: NCHW feature map, f32, single block (static-remainder chunk).
    shape = (2, 4, 16, 16)
    pred = jax.random.normal(k1, shape, dtype=jnp.float32)
    real = jax.random.normal(k2, shape, dtype=jnp.float32)
    check(mse(pred, real), ref_mse(pred, real))

    # Multi-block path (force tiny row tiles), evenly divided -> no mask.
    check(mse(pred, real, max_block_bytes=4096), ref_mse(pred, real))

    # Ragged last block -> masked path gated by pl.when.
    shape3 = (3, 8, 128)
    pred3 = jax.random.normal(k3, shape3, dtype=jnp.float32)
    real3 = jax.random.normal(k4, shape3, dtype=jnp.float32)
    check(mse(pred3, real3, max_block_bytes=8192), ref_mse(pred3, real3))

    # Exercise the chunked fori_loop accumulation path.
    check(mse(pred, real, chunk_rows=8), ref_mse(pred, real))

    # Native bf16 streaming (cast to f32 only inside the kernel).
    pred_bf = pred.astype(jnp.bfloat16)
    real_bf = real.astype(jnp.bfloat16)
    check(mse(pred_bf, real_bf), ref_mse(pred_bf, real_bf), rtol=1e-4, atol=1e-5)

    # Row count not a multiple of 128*align -> wrapper tail handles remainder.
    shape5 = (2, 4, 16, 17)
    pred5 = jax.random.normal(k1, shape5, dtype=jnp.float32)
    real5 = jax.random.normal(k2, shape5, dtype=jnp.float32)
    check(mse(pred5, real5, max_block_bytes=4096), ref_mse(pred5, real5))

    # Element count shorter than one lane row (pure wrapper path).
    shape6 = (3, 5, 11)
    pred6 = jax.random.normal(k3, shape6, dtype=jnp.float32)
    real6 = jax.random.normal(k4, shape6, dtype=jnp.float32)
    check(mse(pred6, real6), ref_mse(pred6, real6))

    print("KERNEL_OK")
</pallas_src>

<mosaic_0001>
module attributes {stable_mosaic.version = 11 : i64} {
  func.func @kernel(%arg0: i32, %arg1: memref<16x128xf32, #tpu.memory_space<vmem>>, %arg2: memref<16x128xf32, #tpu.memory_space<vmem>>, %arg3: memref<1x8x128xf32, #tpu.memory_space<vmem>>) attributes {dimension_semantics = [#tpu.dimension_semantics<parallel>], iteration_bounds = array<i64: 1>, scalar_prefetch = 0 : i64, scratch_operands = 0 : i64, tpu.core_type = #tpu.core_type<tc>, window_params = [{transform_indices = @transform_0, window_bounds = array<i64: 16, 128>}, {transform_indices = @transform_1, window_bounds = array<i64: 16, 128>}, {transform_indices = @transform_2, window_bounds = array<i64: 1, 8, 128>}]} {
    %cst = arith.constant 0.000000e+00 : f32
    %0 = vector.broadcast %cst : f32 to vector<8x128xf32>
    %c0 = arith.constant 0 : index
    %c0_0 = arith.constant 0 : index
    %1 = vector.load %arg1[%c0, %c0_0] : memref<16x128xf32, #tpu.memory_space<vmem>>, vector<16x128xf32>
    %c0_1 = arith.constant 0 : index
    %c0_2 = arith.constant 0 : index
    %2 = vector.load %arg2[%c0_1, %c0_2] : memref<16x128xf32, #tpu.memory_space<vmem>>, vector<16x128xf32>
    %3 = arith.subf %2, %1 : vector<16x128xf32>
    %4 = arith.mulf %3, %3 : vector<16x128xf32>
    %5 = vector.shape_cast %4 : vector<16x128xf32> to vector<2x8x128xf32>
    %cst_3 = arith.constant dense<0.000000e+00> : vector<8x128xf32>
    %6 = vector.multi_reduction <add>, %5, %cst_3 [0] : vector<2x8x128xf32> to vector<8x128xf32>
    %7 = arith.addf %0, %6 : vector<8x128xf32>
    %c0_4 = arith.constant 0 : index
    %c0_5 = arith.constant 0 : index
    %c0_6 = arith.constant 0 : index
    %8 = vector.load %arg3[%c0_4, %c0_5, %c0_6] : memref<1x8x128xf32, #tpu.memory_space<vmem>>, vector<1x8x128xf32>
    %9 = vector.shape_cast %8 : vector<1x8x128xf32> to vector<8x128xf32>
    %10 = vector.shape_cast %7 : vector<8x128xf32> to vector<1x8x128xf32>
    tpu.vector_store %arg3[%c0_4, %c0_5, %c0_6], %10 {strides = array<i32>} : memref<1x8x128xf32, #tpu.memory_space<vmem>>, vector<1x8x128xf32>,
    return
  }
  func.func @transform_0(%arg0: i32) -> (i32, i32) {
    %c0_i32 = arith.constant 0 : i32
    %c0_i32_0 = arith.constant 0 : i32
    return %arg0, %c0_i32 : i32, i32
  }
  func.func @transform_1(%arg0: i32) -> (i32, i32) {
    %c0_i32 = arith.constant 0 : i32
    %c0_i32_0 = arith.constant 0 : i32
    return %arg0, %c0_i32 : i32, i32
  }
  func.func @transform_2(%arg0: i32) -> (i32, i32, i32) {
    %c0_i32 = arith.constant 0 : i32
    %c0_i32_0 = arith.constant 0 : i32
    %c0_i32_1 = arith.constant 0 : i32
    return %arg0, %c0_i32, %c0_i32_0 : i32, i32, i32
  }
}

</mosaic_0001>

<llo_original>
// kernel: mse.1
$region0: #{mse.1}
  #allocation0 [shape = 'u32[]', space=smem, size = 0x4, offset = 0x4, fixed_abs, tag = 'smem constant byte address 0x4 - core index']
  #allocation1 [shape = 'u32[144,128]{1,0:T(1,128)}', space=vmem, size = 0x12000, scoped, tag = 'internal scratch']
  %s0 = inlined_call_operand.vmem [shape: f32[16,128], index: 0, kind: input, shape index: {}]
  %s1 = inlined_call_operand.vmem [shape: f32[16,128], index: 1, kind: input, shape index: {}]
  %s2 = inlined_call_operand.vmem [shape: f32[1,8,128], index: 2, kind: output, shape index: {}]
  %s3 = sld [smem:[#allocation0]]
  $region18: #{mse.1} parent=0
    _
  %s5 = ssub.s32 1, %s3
  %s6 = scalar_select 0, %s5, %s3
  // Predicated region
  $region2: #{mse.1} parent=0 // pred_check
    _
  $region3: #{mse.1} parent=0 // pred_check_branch
    %8 = sbr.rel (0) target = $region5
  $region4: #{mse.1} parent=0 // pred_region
    _
  $region5: #{mse.1} parent=0 // pred_fallthru
    _
  // Predicated region
  $region6: #{mse.1} parent=0 // pred_check
    _
  $region7: #{mse.1} parent=0 // pred_check_branch
    %10 = sbr.rel (0) target = $region9
  $region8: #{mse.1} parent=0 // pred_region
    _
  $region9: #{mse.1} parent=0 // pred_fallthru
    _
  %v11 = vld [vmem:[%s0] sm:$0xff]
  %v12 = vld [vmem:[%s0 + $0x8] sm:$0xff]
  %v13 = vld [vmem:[%s1] sm:$0xff]
  %v14 = vld [vmem:[%s1 + $0x8] sm:$0xff]
  %v15 = vsub.f32 %v13, %v11
  %v16 = vsub.f32 %v14, %v12
  %v17 = vmul.f32 %v15, %v15
  %v18 = vmul.f32 %v16, %v16
  %v19 = vadd.f32 %v17, %v18
  %v20 = vadd.f32 %v19, 0.0
  %21 = vst [vmem:[%s2] sm:$0xff] %v20
  // Predicated region
  $region10: #{mse.1} parent=0 // pred_check
    _
  $region11: #{mse.1} parent=0 // pred_check_branch
    %23 = sbr.rel (0) target = $region13
  $region12: #{mse.1} parent=0 // pred_region
    _
  $region13: #{mse.1} parent=0 // pred_fallthru
    _
  // Predicated region
  $region14: #{mse.1} parent=0 // pred_check
    _
  $region15: #{mse.1} parent=0 // pred_check_branch
    %25 = sbr.rel (0) target = $region17
  $region16: #{mse.1} parent=0 // pred_region
    _
  $region17: #{mse.1} parent=0 // pred_fallthru
    _

</llo_original>
